<compile_context>
chip_gen: v5e
topology: v5e:2x2
jax: 0.10.0
libtpu: 0.0.40
codegen_flags: <defaults>
</compile_context>

<pallas_src>
import functools

import jax
import jax.numpy as jnp
from jax import lax
from jax.experimental import pallas as pl
from jax.experimental.pallas import tpu as pltpu


def _encoder_kernel(x_ref, w1_ref, b1_ref, w2_ref, b2_ref, wh_ref, bh_ref,
                    out_ref, *, latent_size):
    # Compute dtype for the MXU (f32 or bf16), chosen by the wrapper via the
    # dtype the weights were passed in.  Accumulation is always f32.
    cdt = w1_ref.dtype

    # h1 = relu(x @ W1 + b1)
    h1 = jnp.dot(x_ref[...], w1_ref[...], preferred_element_type=jnp.float32)
    h1 = jnp.maximum(h1 + b1_ref[...], 0.0)

    # h2 = relu(h1 @ W2 + b2)
    h2 = jnp.dot(h1.astype(cdt), w2_ref[...], preferred_element_type=jnp.float32)
    h2 = jnp.maximum(h2 + b2_ref[...], 0.0)

    # Fused head: [mu | log_sigma] in a single lane-dense matmul on h2.
    head = jnp.dot(h2.astype(cdt), wh_ref[...],
                   preferred_element_type=jnp.float32) + bh_ref[...]

    # First `latent_size` lanes are mu (identity); the rest are sigma = exp(.).
    cols = lax.broadcasted_iota(jnp.int32, head.shape, dimension=1)
    out_ref[...] = jnp.where(cols < latent_size, head,
                             jnp.exp(head)).astype(out_ref.dtype)


def encoder_forward(x, params, *, block_b=256, use_bf16=False):
    """x: [B, D_in] float32.  params: dict of weights/biases.  Returns (mu, sigma)."""
    B, D_in = x.shape
    H = params["w1"].shape[1]
    L = params["wmu"].shape[1]

    # Fuse the two output heads: [H, 2L] weight, [1, 2L] bias.
    w_head = jnp.concatenate([params["wmu"], params["wls"]], axis=1)
    b_head = jnp.concatenate([params["bmu"], params["bls"]], axis=1)

    w1, b1 = params["w1"], params["b1"]
    w2, b2 = params["w2"], params["b2"]

    # Optional bf16 MXU path: cast matmul operands (not biases) in the wrapper
    # so the weight DMA itself is halved; kernel accumulates in f32.
    if use_bf16:
        x_in = x.astype(jnp.bfloat16)
        w1c = w1.astype(jnp.bfloat16)
        w2c = w2.astype(jnp.bfloat16)
        whc = w_head.astype(jnp.bfloat16)
    else:
        x_in, w1c, w2c, whc = x, w1, w2, w_head

    # Batch tile: multiple of 8 sublanes; pad B so the tile divides it exactly.
    if B >= block_b:
        tb = (block_b // 8) * 8
    else:
        tb = pl.cdiv(B, 8) * 8
    tb = max(tb, 8)
    Bp = pl.cdiv(B, tb) * tb
    if Bp != B:
        x_in = jnp.pad(x_in, ((0, Bp - B), (0, 0)))

    grid = (Bp // tb,)

    resident = lambda shape: pl.BlockSpec(shape, lambda i: (0, 0))

    kernel = functools.partial(_encoder_kernel, latent_size=L)

    fused = pl.pallas_call(
        kernel,
        out_shape=jax.ShapeDtypeStruct((Bp, 2 * L), jnp.float32),
        grid=grid,
        in_specs=[
            pl.BlockSpec((tb, D_in), lambda i: (i, 0)),   # x tile (pipelined)
            resident((D_in, H)),                          # w1
            resident((1, H)),                             # b1
            resident((H, H)),                             # w2
            resident((1, H)),                             # b2
            resident((H, 2 * L)),                         # fused head weight
            resident((1, 2 * L)),                         # fused head bias
        ],
        out_specs=pl.BlockSpec((tb, 2 * L), lambda i: (i, 0)),
        compiler_params=pltpu.CompilerParams(
            dimension_semantics=("parallel",),
            vmem_limit_bytes=48 * 1024 * 1024,
        ),
    )(x_in, w1c, b1, w2c, b2, whc, b_head)

    fused = fused[:B]
    mu = fused[:, :L]
    sigma = fused[:, L:]
    return mu, sigma


def init_params(key, D_in, H, latent_size):
    """Deterministic synthetic init (Linear-like: small uniform)."""
    keys = jax.random.split(key, 8)

    def lin(kw, kb, fan_in, fan_out):
        bound = 1.0 / jnp.sqrt(fan_in)
        w = jax.random.uniform(kw, (fan_in, fan_out), jnp.float32, -bound, bound)
        b = jax.random.uniform(kb, (1, fan_out), jnp.float32, -bound, bound)
        return w, b

    w1, b1 = lin(keys[0], keys[1], D_in, H)
    w2, b2 = lin(keys[2], keys[3], H, H)
    wmu, bmu = lin(keys[4], keys[5], H, latent_size)
    wls, bls = lin(keys[6], keys[7], H, latent_size)
    return dict(w1=w1, b1=b1, w2=w2, b2=b2,
                wmu=wmu, bmu=bmu, wls=wls, bls=bls)


def reference_forward(x, p):
    h1 = jnp.maximum(x @ p["w1"] + p["b1"], 0.0)
    h2 = jnp.maximum(h1 @ p["w2"] + p["b2"], 0.0)
    mu = h2 @ p["wmu"] + p["bmu"]
    sigma = jnp.exp(h2 @ p["wls"] + p["bls"])
    return mu, sigma


if __name__ == "__main__":
    B, D_in, H, latent_size = 8, 32, 32, 16

    key = jax.random.PRNGKey(0)
    kx, kp = jax.random.split(key)
    x = jax.random.normal(kx, (B, D_in), jnp.float32)
    params = init_params(kp, D_in, H, latent_size)

    mu_ref, sigma_ref = reference_forward(x, params)

    # f32 MXU path: tight tolerance.
    mu, sigma = encoder_forward(x, params, use_bf16=False)
    mu, sigma = jax.block_until_ready((mu, sigma))
    assert jnp.allclose(mu, mu_ref, atol=1e-5, rtol=1e-5)
    assert jnp.allclose(sigma, sigma_ref, atol=1e-5, rtol=1e-5)

    # bf16 MXU path (f32 accumulation): looser tolerance.
    mu_b, sigma_b = encoder_forward(x, params, use_bf16=True)
    mu_b, sigma_b = jax.block_until_ready((mu_b, sigma_b))
    assert jnp.allclose(mu_b, mu_ref, atol=5e-2, rtol=5e-2)
    assert jnp.allclose(sigma_b, sigma_ref, atol=5e-2, rtol=5e-2)

    print("KERNEL_OK")
</pallas_src>

<mosaic_0001>
module attributes {stable_mosaic.version = 11 : i64} {
  func.func @_encoder_kernel(%arg0: i32, %arg1: memref<8x32xf32, #tpu.memory_space<vmem>>, %arg2: memref<32x32xf32, #tpu.memory_space<vmem>>, %arg3: memref<1x32xf32, #tpu.memory_space<vmem>>, %arg4: memref<32x32xf32, #tpu.memory_space<vmem>>, %arg5: memref<1x32xf32, #tpu.memory_space<vmem>>, %arg6: memref<32x32xf32, #tpu.memory_space<vmem>>, %arg7: memref<1x32xf32, #tpu.memory_space<vmem>>, %arg8: memref<8x32xf32, #tpu.memory_space<vmem>>) attributes {dimension_semantics = [#tpu.dimension_semantics<parallel>], iteration_bounds = array<i64: 1>, scalar_prefetch = 0 : i64, scratch_operands = 0 : i64, tpu.core_type = #tpu.core_type<tc>, window_params = [{transform_indices = @transform_0, window_bounds = array<i64: 8, 32>}, {pipeline_mode = #tpu.pipeline_mode<synchronous>, transform_indices = @transform_1, window_bounds = array<i64: 32, 32>}, {pipeline_mode = #tpu.pipeline_mode<synchronous>, transform_indices = @transform_2, window_bounds = array<i64: 1, 32>}, {pipeline_mode = #tpu.pipeline_mode<synchronous>, transform_indices = @transform_3, window_bounds = array<i64: 32, 32>}, {pipeline_mode = #tpu.pipeline_mode<synchronous>, transform_indices = @transform_4, window_bounds = array<i64: 1, 32>}, {pipeline_mode = #tpu.pipeline_mode<synchronous>, transform_indices = @transform_5, window_bounds = array<i64: 32, 32>}, {pipeline_mode = #tpu.pipeline_mode<synchronous>, transform_indices = @transform_6, window_bounds = array<i64: 1, 32>}, {transform_indices = @transform_7, window_bounds = array<i64: 8, 32>}]} {
    %c0 = arith.constant 0 : index
    %c0_0 = arith.constant 0 : index
    %0 = vector.load %arg1[%c0, %c0_0] : memref<8x32xf32, #tpu.memory_space<vmem>>, vector<8x32xf32>
    %c0_1 = arith.constant 0 : index
    %c0_2 = arith.constant 0 : index
    %1 = vector.load %arg2[%c0_1, %c0_2] : memref<32x32xf32, #tpu.memory_space<vmem>>, vector<32x32xf32>
    %cst = arith.constant dense<0.000000e+00> : vector<8x32xf32>
    %2 = tpu.matmul %0, %1, %cst {dimension_numbers = #tpu.dot_dimension_numbers<[1], [0], [0], [1], [0, 0, 1, 1], [], []>} : vector<8x32xf32>, vector<32x32xf32>, vector<8x32xf32> -> vector<8x32xf32>
    %c0_3 = arith.constant 0 : index
    %c0_4 = arith.constant 0 : index
    %3 = vector.load %arg3[%c0_3, %c0_4] : memref<1x32xf32, #tpu.memory_space<vmem>>, vector<1x32xf32>
    %4 = vector.broadcast %3 : vector<1x32xf32> to vector<8x32xf32>
    %5 = arith.addf %2, %4 : vector<8x32xf32>
    %cst_5 = arith.constant 0.000000e+00 : f32
    %6 = vector.broadcast %cst_5 : f32 to vector<8x32xf32>
    %7 = arith.maximumf %5, %6 : vector<8x32xf32>
    %c0_6 = arith.constant 0 : index
    %c0_7 = arith.constant 0 : index
    %8 = vector.load %arg4[%c0_6, %c0_7] : memref<32x32xf32, #tpu.memory_space<vmem>>, vector<32x32xf32>
    %cst_8 = arith.constant dense<0.000000e+00> : vector<8x32xf32>
    %9 = tpu.matmul %7, %8, %cst_8 {dimension_numbers = #tpu.dot_dimension_numbers<[1], [0], [0], [1], [0, 0, 1, 1], [], []>} : vector<8x32xf32>, vector<32x32xf32>, vector<8x32xf32> -> vector<8x32xf32>
    %c0_9 = arith.constant 0 : index
    %c0_10 = arith.constant 0 : index
    %10 = vector.load %arg5[%c0_9, %c0_10] : memref<1x32xf32, #tpu.memory_space<vmem>>, vector<1x32xf32>
    %11 = vector.broadcast %10 : vector<1x32xf32> to vector<8x32xf32>
    %12 = arith.addf %9, %11 : vector<8x32xf32>
    %cst_11 = arith.constant 0.000000e+00 : f32
    %13 = vector.broadcast %cst_11 : f32 to vector<8x32xf32>
    %14 = arith.maximumf %12, %13 : vector<8x32xf32>
    %c0_12 = arith.constant 0 : index
    %c0_13 = arith.constant 0 : index
    %15 = vector.load %arg6[%c0_12, %c0_13] : memref<32x32xf32, #tpu.memory_space<vmem>>, vector<32x32xf32>
    %cst_14 = arith.constant dense<0.000000e+00> : vector<8x32xf32>
    %16 = tpu.matmul %14, %15, %cst_14 {dimension_numbers = #tpu.dot_dimension_numbers<[1], [0], [0], [1], [0, 0, 1, 1], [], []>} : vector<8x32xf32>, vector<32x32xf32>, vector<8x32xf32> -> vector<8x32xf32>
    %c0_15 = arith.constant 0 : index
    %c0_16 = arith.constant 0 : index
    %17 = vector.load %arg7[%c0_15, %c0_16] : memref<1x32xf32, #tpu.memory_space<vmem>>, vector<1x32xf32>
    %18 = vector.broadcast %17 : vector<1x32xf32> to vector<8x32xf32>
    %19 = arith.addf %16, %18 : vector<8x32xf32>
    %20 = tpu.iota {dimensions = array<i32: 1>} : vector<8x32xi32>
    %c16_i32 = arith.constant 16 : i32
    %21 = vector.broadcast %c16_i32 : i32 to vector<8x32xi32>
    %22 = arith.cmpi slt, %20, %21 : vector<8x32xi32>
    %23 = math.exp %19 : vector<8x32xf32>
    %24 = arith.select %22, %19, %23 : vector<8x32xi1>, vector<8x32xf32>
    %c0_17 = arith.constant 0 : index
    %c0_18 = arith.constant 0 : index
    %25 = vector.load %arg8[%c0_17, %c0_18] : memref<8x32xf32, #tpu.memory_space<vmem>>, vector<8x32xf32>
    tpu.vector_store %arg8[%c0_17, %c0_18], %24 {strides = array<i32>} : memref<8x32xf32, #tpu.memory_space<vmem>>, vector<8x32xf32>,
    return
  }
  func.func @transform_0(%arg0: i32) -> (i32, i32) {
    %c0_i32 = arith.constant 0 : i32
    %c0_i32_0 = arith.constant 0 : i32
    return %arg0, %c0_i32 : i32, i32
  }
  func.func @transform_1(%arg0: i32) -> (i32, i32) {
    %c0_i32 = arith.constant 0 : i32
    %c0_i32_0 = arith.constant 0 : i32
    %c0_i32_1 = arith.constant 0 : i32
    return %c0_i32, %c0_i32_0 : i32, i32
  }
  func.func @transform_2(%arg0: i32) -> (i32, i32) {
    %c0_i32 = arith.constant 0 : i32
    %c0_i32_0 = arith.constant 0 : i32
    %c0_i32_1 = arith.constant 0 : i32
    return %c0_i32, %c0_i32_0 : i32, i32
  }
  func.func @transform_3(%arg0: i32) -> (i32, i32) {
    %c0_i32 = arith.constant 0 : i32
    %c0_i32_0 = arith.constant 0 : i32
    %c0_i32_1 = arith.constant 0 : i32
    return %c0_i32, %c0_i32_0 : i32, i32
  }
  func.func @transform_4(%arg0: i32) -> (i32, i32) {
    %c0_i32 = arith.constant 0 : i32
    %c0_i32_0 = arith.constant 0 : i32
    %c0_i32_1 = arith.constant 0 : i32
    return %c0_i32, %c0_i32_0 : i32, i32
  }
  func.func @transform_5(%arg0: i32) -> (i32, i32) {
    %c0_i32 = arith.constant 0 : i32
    %c0_i32_0 = arith.constant 0 : i32
    %c0_i32_1 = arith.constant 0 : i32
    return %c0_i32, %c0_i32_0 : i32, i32
  }
  func.func @transform_6(%arg0: i32) -> (i32, i32) {
    %c0_i32 = arith.constant 0 : i32
    %c0_i32_0 = arith.constant 0 : i32
    %c0_i32_1 = arith.constant 0 : i32
    return %c0_i32, %c0_i32_0 : i32, i32
  }
  func.func @transform_7(%arg0: i32) -> (i32, i32) {
    %c0_i32 = arith.constant 0 : i32
    %c0_i32_0 = arith.constant 0 : i32
    return %arg0, %c0_i32 : i32, i32
  }
}

</mosaic_0001>

<llo_original>
// kernel: tpu_custom_call.1
$region0: #{tpu_custom_call.1}
  #allocation0 [shape = 'u32[]', space=smem, size = 0x4, offset = 0x4, fixed_abs, tag = 'smem constant byte address 0x4 - core index']
  #allocation1 [shape = 'u32[72,128]{1,0:T(1,128)}', space=vmem, size = 0x9000, scoped, tag = 'internal scratch']
  %s0 = inlined_call_operand.hbm [shape: f32[8,32], index: 0, kind: input, shape index: {}]
  %s1 = inlined_call_operand.hbm [shape: f32[32,32], index: 1, kind: input, shape index: {}]
  %s2 = inlined_call_operand.vmem [shape: f32[1,32], index: 2, kind: input, shape index: {}]
  %s3 = inlined_call_operand.hbm [shape: f32[32,32], index: 3, kind: input, shape index: {}]
  %s4 = inlined_call_operand.vmem [shape: f32[1,32], index: 4, kind: input, shape index: {}]
  %s5 = inlined_call_operand.hbm [shape: f32[32,32], index: 5, kind: input, shape index: {}]
  %s6 = inlined_call_operand.vmem [shape: f32[1,32], index: 6, kind: input, shape index: {}]
  %s7 = inlined_call_operand.hbm [shape: f32[8,32], index: 7, kind: output, shape index: {}]
  %s8 = sld [smem:[#allocation0]]
  $region54: #{tpu_custom_call.1} parent=0
    _
  %s10 = ssub.s32 1, %s8
  %s11 = scalar_select 0, %s10, %s8
  $region1: #{tpu_custom_call.1} parent=0
    #allocation2 [shape = 'u8[4096]{0}', space=vmem, size = 0x1000, scoped, tag = 'input window, operand 0, single buffered']
    #allocation3 [shape = 's32[1]{0}', space=sflag, size = 0x4, scoped, tag = 'scoped memory for tpu_custom_call.1']
    #allocation4 [shape = 's32[1]{0}', space=sflag, size = 0x4, scoped, tag = 'scoped memory for tpu_custom_call.1']
    #allocation5 [shape = 'u8[16384]{0}', space=vmem, size = 0x4000, scoped, tag = 'input window, operand 1, single buffered']
    #allocation6 [shape = 's32[1]{0}', space=sflag, size = 0x4, scoped, tag = 'scoped memory for tpu_custom_call.1']
    #allocation7 [shape = 'u8[16384]{0}', space=vmem, size = 0x4000, scoped, tag = 'input window, operand 3, single buffered']
    #allocation8 [shape = 'u8[16384]{0}', space=vmem, size = 0x4000, scoped, tag = 'input window, operand 5, single buffered']
    #allocation9 [shape = 's32[1]{0}', space=sflag, size = 0x4, scoped, tag = 'scoped memory for tpu_custom_call.1']
    #allocation10 [shape = 'u8[4096]{0}', space=vmem, size = 0x1000, scoped, tag = 'output window, operand 0, single buffered']
    %12 = vsyncpa [#allocation3], 0
    %13 = vsyncpa [#allocation6], 0
    %14 = vsyncpa [#allocation9], 0
    %15 = vsyncpa [#allocation4], 0
    // Predicated region
    $region2: #{tpu_custom_call.1} parent=1 // pred_check
      _
    $region3: #{tpu_custom_call.1} parent=1 // pred_check_branch
      %17 = sbr.rel (0) target = $region5
    $region4: #{tpu_custom_call.1} parent=1 // pred_region
      %19 = vsyncadd [#allocation3], 0
      %s21 = sshll.u32 %s0, 4
      %s22 = int_to_ptr.hbm [resolvable:$true] %s21
      %s23 = sshll.u32 [#allocation2], 4
      %s24 = int_to_ptr.vmem [resolvable:$true] %s23
      %26 = dma.hbm_to_vmem [thread:$0]  %s22, 128, %s24, [#allocation3]
    $region5: #{tpu_custom_call.1} parent=1 // pred_fallthru
      _
    // Predicated region
    $region6: #{tpu_custom_call.1} parent=1 // pred_check
      _
    $region7: #{tpu_custom_call.1} parent=1 // pred_check_branch
      %28 = sbr.rel (0) target = $region9
    $region8: #{tpu_custom_call.1} parent=1 // pred_region
      %30 = vsyncadd [#allocation6], 0
      %s31 = sshll.u32 %s1, 4
      %s32 = int_to_ptr.hbm [resolvable:$true] %s31
      %s33 = sshll.u32 [#allocation5], 4
      %s34 = int_to_ptr.vmem [resolvable:$true] %s33
      %39 = dma.hbm_to_vmem [thread:$0]  %s32, 512, %s34, [#allocation6], 128, 128, 8
    $region9: #{tpu_custom_call.1} parent=1 // pred_fallthru
      _
    // Predicated region
    $region10: #{tpu_custom_call.1} parent=1 // pred_check
      _
    $region11: #{tpu_custom_call.1} parent=1 // pred_check_branch
      %41 = sbr.rel (0) target = $region13
    $region12: #{tpu_custom_call.1} parent=1 // pred_region
      _
    $region13: #{tpu_custom_call.1} parent=1 // pred_fallthru
      _
    // Predicated region
    $region14: #{tpu_custom_call.1} parent=1 // pred_check
      _
    $region15: #{tpu_custom_call.1} parent=1 // pred_check_branch
      %43 = sbr.rel (0) target = $region17
    $region16: #{tpu_custom_call.1} parent=1 // pred_region
      %45 = vsyncadd [#allocation6], 0
      %s46 = sshll.u32 %s3, 4
      %s47 = int_to_ptr.hbm [resolvable:$true] %s46
      %s48 = sshll.u32 [#allocation7], 4
      %s49 = int_to_ptr.vmem [resolvable:$true] %s48
      %54 = dma.hbm_to_vmem [thread:$0]  %s47, 512, %s49, [#allocation6], 128, 128, 8
    $region17: #{tpu_custom_call.1} parent=1 // pred_fallthru
      _
    // Predicated region
    $region18: #{tpu_custom_call.1} parent=1 // pred_check
      _
    $region19: #{tpu_custom_call.1} parent=1 // pred_check_branch
      %56 = sbr.rel (0) target = $region21
    $region20: #{tpu_custom_call.1} parent=1 // pred_region
      _
    $region21: #{tpu_custom_call.1} parent=1 // pred_fallthru
      _
    // Predicated region
    $region22: #{tpu_custom_call.1} parent=1 // pred_check
      _
    $region23: #{tpu_custom_call.1} parent=1 // pred_check_branch
      %58 = sbr.rel (0) target = $region25
    $region24: #{tpu_custom_call.1} parent=1 // pred_region
      %60 = vsyncadd [#allocation9], 0
      %s61 = sshll.u32 %s5, 4
      %s62 = int_to_ptr.hbm [resolvable:$true] %s61
      %s63 = sshll.u32 [#allocation8], 4
      %s64 = int_to_ptr.vmem [resolvable:$true] %s63
      %69 = dma.hbm_to_vmem [thread:$0]  %s62, 512, %s64, [#allocation9], 128, 128, 8
    $region25: #{tpu_custom_call.1} parent=1 // pred_fallthru
      _
    // Predicated region
    $region26: #{tpu_custom_call.1} parent=1 // pred_check
      _
    $region27: #{tpu_custom_call.1} parent=1 // pred_check_branch
      %71 = sbr.rel (0) target = $region29
    $region28: #{tpu_custom_call.1} parent=1 // pred_region
      _
    $region29: #{tpu_custom_call.1} parent=1 // pred_fallthru
      _
    // Predicated region
    $region30: #{tpu_custom_call.1} parent=1 // pred_check
      _
    $region31: #{tpu_custom_call.1} parent=1 // pred_check_branch
      %73 = sbr.rel (0) target = $region33
    $region32: #{tpu_custom_call.1} parent=1 // pred_region
      %75 = dma.done [#allocation3], 128
    $region33: #{tpu_custom_call.1} parent=1 // pred_fallthru
      _
    // Predicated region
    $region34: #{tpu_custom_call.1} parent=1 // pred_check
      _
    $region35: #{tpu_custom_call.1} parent=1 // pred_check_branch
      %77 = sbr.rel (0) target = $region37
    $region36: #{tpu_custom_call.1} parent=1 // pred_region
      %79 = dma.done [#allocation6], 512
    $region37: #{tpu_custom_call.1} parent=1 // pred_fallthru
      _
    // Predicated region
    $region38: #{tpu_custom_call.1} parent=1 // pred_check
      _
    $region39: #{tpu_custom_call.1} parent=1 // pred_check_branch
      %81 = sbr.rel (0) target = $region41
    $region40: #{tpu_custom_call.1} parent=1 // pred_region
      %83 = dma.done [#allocation6], 512
    $region41: #{tpu_custom_call.1} parent=1 // pred_fallthru
      _
    // Predicated region
    $region42: #{tpu_custom_call.1} parent=1 // pred_check
      _
    $region43: #{tpu_custom_call.1} parent=1 // pred_check_branch
      %85 = sbr.rel (0) target = $region45
    $region44: #{tpu_custom_call.1} parent=1 // pred_region
      %87 = dma.done [#allocation9], 512
    $region45: #{tpu_custom_call.1} parent=1 // pred_fallthru
      _
    %v88 = vld [vmem:[#allocation2] sm:$0xff]
    %v89 = vld [vmem:[#allocation5] sm:$0xff]
    %v90 = vld [vmem:[#allocation5 + $0x8] sm:$0xff]
    %v91 = vld [vmem:[#allocation5 + $0x10] sm:$0xff]
    %v92 = vld [vmem:[#allocation5 + $0x18] sm:$0xff]
    %v93 = vld [vmem:[%s2] sm:$0x1]
    %v95 = vperm.slane %v93, 0
    %vm97 = vcmask 261120
    %v99 = vsel %vm97, %v88, 0
    %101 = vmatpush.msra.mxu0 0.0
    %102 = vmatpush.msra.mxu0 0.0
    %103 = vmatpush.msra.mxu0 0.0
    %104 = vmatpush.msra.mxu0 0.0
    %105 = vmatpush.msra.mxu0 0.0
    %106 = vmatpush.msra.mxu0 0.0
    %107 = vmatpush.msra.mxu0 0.0
    %108 = vmatpush.msra.mxu0 0.0
    %109 = vmatpush.msra.mxu0 0.0
    %110 = vmatpush.msra.mxu0 0.0
    %111 = vmatpush.msra.mxu0 0.0
    %112 = vmatpush.msra.mxu0 0.0
    %113 = vmatpush.msra.mxu0 %v92
    %114 = vmatpush.msra.mxu0 %v91
    %115 = vmatpush.msra.mxu0 %v90
    %116 = vmatpush.msra.mxu0 %v89
    %117 = vmatmul.f32.gmra.mxu0 %v99
    %v118 = vpop.f32.mrf.mxu0
    %v119 = vadd.f32 %v95, %v118
    %120 = vdwg.mxu0
    %v121 = vmax.f32 %v119, 0.0
    %v122 = vld [vmem:[#allocation7] sm:$0xff]
    %v123 = vld [vmem:[#allocation7 + $0x8] sm:$0xff]
    %v124 = vld [vmem:[#allocation7 + $0x10] sm:$0xff]
    %v125 = vld [vmem:[#allocation7 + $0x18] sm:$0xff]
    %v126 = vld [vmem:[%s4] sm:$0x1]
    %v128 = vperm.slane %v126, 0
    %v131 = vsel %vm97, %v121, 0
    %133 = vmatpush.msra.mxu0 0.0
    %134 = vmatpush.msra.mxu0 0.0
    %135 = vmatpush.msra.mxu0 0.0
    %136 = vmatpush.msra.mxu0 0.0
    %137 = vmatpush.msra.mxu0 0.0
    %138 = vmatpush.msra.mxu0 0.0
    %139 = vmatpush.msra.mxu0 0.0
    %140 = vmatpush.msra.mxu0 0.0
    %141 = vmatpush.msra.mxu0 0.0
    %142 = vmatpush.msra.mxu0 0.0
    %143 = vmatpush.msra.mxu0 0.0
    %144 = vmatpush.msra.mxu0 0.0
    %145 = vmatpush.msra.mxu0 %v125
    %146 = vmatpush.msra.mxu0 %v124
    %147 = vmatpush.msra.mxu0 %v123
    %148 = vmatpush.msra.mxu0 %v122
    %149 = vmatmul.f32.gmra.mxu0 %v131
    %v150 = vpop.f32.mrf.mxu0
    %v151 = vadd.f32 %v128, %v150
    %152 = vdwg.mxu0
    %v153 = vmax.f32 %v151, 0.0
    %v154 = vld [vmem:[#allocation8] sm:$0xff]
    %v155 = vld [vmem:[#allocation8 + $0x8] sm:$0xff]
    %v156 = vld [vmem:[#allocation8 + $0x10] sm:$0xff]
    %v157 = vld [vmem:[#allocation8 + $0x18] sm:$0xff]
    %v158 = vld [vmem:[%s6] sm:$0x1]
    %v160 = vperm.slane %v158, 0
    %v163 = vsel %vm97, %v153, 0
    %165 = vmatpush.msra.mxu0 0.0
    %166 = vmatpush.msra.mxu0 0.0
    %167 = vmatpush.msra.mxu0 0.0
    %168 = vmatpush.msra.mxu0 0.0
    %169 = vmatpush.msra.mxu0 0.0
    %170 = vmatpush.msra.mxu0 0.0
    %171 = vmatpush.msra.mxu0 0.0
    %172 = vmatpush.msra.mxu0 0.0
    %173 = vmatpush.msra.mxu0 0.0
    %174 = vmatpush.msra.mxu0 0.0
    %175 = vmatpush.msra.mxu0 0.0
    %176 = vmatpush.msra.mxu0 0.0
    %177 = vmatpush.msra.mxu0 %v157
    %178 = vmatpush.msra.mxu0 %v156
    %179 = vmatpush.msra.mxu0 %v155
    %180 = vmatpush.msra.mxu0 %v154
    %181 = vmatmul.f32.gmra.mxu0 %v163
    %v182 = vpop.f32.mrf.mxu0
    %v183 = vadd.f32 %v160, %v182
    %184 = vdwg.mxu0
    %v185 = vlaneseq
    %v186 = vand.u32 %v185, 127
    %vm187 = vcmp.lt.s32.totalorder %v186, 16
    %v188 = vmul.f32 %v183, 1.442695
    %v189 = vpow.pop %v188
    %v190 = vsel %vm187, %v183, %v189
    %191 = vst.msk [vmem:[#allocation10] sm:$0xff] %vm97, %v190
    // Predicated region
    $region46: #{tpu_custom_call.1} parent=1 // pred_check
      _
    $region47: #{tpu_custom_call.1} parent=1 // pred_check_branch
      %193 = sbr.rel (0) target = $region49
    $region48: #{tpu_custom_call.1} parent=1 // pred_region
      %195 = vsyncadd [#allocation4], 0
      %s197 = sshll.u32 [#allocation10], 4
      %s198 = int_to_ptr.vmem [resolvable:$true] %s197
      %s199 = sshll.u32 %s7, 4
      %s200 = int_to_ptr.hbm [resolvable:$true] %s199
      %202 = dma.vmem_to_hbm [thread:$0]  %s198, 128, %s200, [#allocation4]
    $region49: #{tpu_custom_call.1} parent=1 // pred_fallthru
      _
    // Predicated region
    $region50: #{tpu_custom_call.1} parent=1 // pred_check
      _
    $region51: #{tpu_custom_call.1} parent=1 // pred_check_branch
      %204 = sbr.rel (0) target = $region53
    $region52: #{tpu_custom_call.1} parent=1 // pred_region
      %206 = dma.done [#allocation4], 128
    $region53: #{tpu_custom_call.1} parent=1 // pred_fallthru
      _
    %207 = vsyncpa [#allocation3], 1
    %208 = vsyncpa [#allocation6], 1
    %209 = vsyncpa [#allocation9], 1
    %210 = vsyncpa [#allocation4], 1

</llo_original>
